<compile_context>
chip_gen: v6e
topology: v6e:2x2x1
jax: 0.10.0
libtpu: 0.0.40
codegen_flags: <defaults>
</compile_context>

<pallas_src>
import functools

import jax
import jax.numpy as jnp
from jax.experimental import pallas as pl
from jax.experimental.pallas import tpu as pltpu


def attention2d_kernel(x_ref, w1_ref, b1_ref, wcg_ref, bcg_ref, w2_ref, b2_ref,
                       out_ref, acc_ref, *, kernel_size, padding, true_len, inv_freq):
    f = pl.program_id(1)

    @pl.when(f == 0)
    def _():
        acc_ref[...] = jnp.zeros_like(acc_ref)

    # Partial freq sum for this (batch, f-block): (f_blk, C, Tp) -> (C, Tp).
    acc_ref[...] += jnp.sum(x_ref[...].astype(jnp.float32), axis=0)

    @pl.when(f == pl.num_programs(1) - 1)
    def _():
        xm = acc_ref[...] * inv_freq                      # freq mean, (C, Tp)
        C, Tp = xm.shape

        # Within-segment time index of each lane (batch is a grid axis, so the
        # lane index *is* the time index -- no per-batch mod chain needed).
        pos = jax.lax.broadcasted_iota(jnp.int32, (C, Tp), 1)

        # conv1d1 (BN scale folded into w1, BN shift is the bias): one tiny
        # matmul per tap; taps are XLU rolls + boundary masks (no im2col).
        y = None
        for k in range(kernel_size):
            d = k - padding
            if d == 0:
                tap = xm                                  # pad lanes are already 0
            else:
                tap = pltpu.roll(xm, shift=(-d) % Tp, axis=1)
                valid = (pos >= -d) & (pos < true_len - d)
                tap = jnp.where(valid, tap, 0.0)
            contrib = jnp.dot(w1_ref[k], tap, preferred_element_type=jnp.float32)
            y = contrib if y is None else y + contrib
        y = y + b1_ref[...]                               # (H, Tp)

        # ContextGating: res = y * sigmoid(Wcg @ y + bcg)   (stable sigmoid).
        lin = jnp.dot(wcg_ref[...], y, preferred_element_type=jnp.float32) + bcg_ref[...]
        e = jnp.exp(-jnp.abs(lin))
        r = 1.0 / (1.0 + e)
        sig = jnp.where(lin >= 0.0, r, e * r)
        res = y * sig

        # conv1d2 (kernel size 1); 1/temperature already folded into w2/b2.
        z = jnp.dot(w2_ref[...], res, preferred_element_type=jnp.float32) + b2_ref[...]

        # Softmax over channels (sublane axis); exact division (1e-5 contract).
        z = z - jnp.max(z, axis=0, keepdims=True)
        ez = jnp.exp(z)
        sm = ez / jnp.sum(ez, axis=0, keepdims=True)

        out_ref[...] = sm.astype(out_ref.dtype)


def attention2d_freq(x, w1, bn_gamma, bn_beta, bn_mean, bn_var, bn_eps,
                     wcg, bcg, w2, b2, *, kernel_size, stride, padding, temperature):
    """x: (B, C, T, F); w1: (H, C, K) PyTorch conv1d weight. Returns (B, O, T, 1)."""
    B, C, T, F = x.shape
    H = w1.shape[0]
    O = w2.shape[0]

    t_out = (T + 2 * padding - kernel_size) // stride + 1
    if stride != 1 or t_out != T:
        raise NotImplementedError("attention2d_freq kernel supports stride=1 'same' conv only")

    # ---- weight folding (no per-lane BN / temperature multiplies in the kernel)
    inv_std = bn_gamma / jnp.sqrt(bn_var + bn_eps)                    # (H,)
    w1_taps = jnp.transpose(w1 * inv_std[:, None, None], (2, 0, 1))   # (K, H, C)
    b1 = (bn_beta - bn_mean * inv_std).reshape(H, 1)                  # BN shift -> conv bias
    bcg2 = bcg.reshape(H, 1)
    w2f = w2 / temperature
    b2f = (b2 / temperature).reshape(O, 1)

    # ---- input layout: (B, F, C, Tp) with time lane-padded to a multiple of 128
    Tp = max(128, ((T + 127) // 128) * 128)
    xr = jnp.transpose(x, (0, 3, 1, 2))                               # (B, F, C, T)
    if Tp != T:
        xr = jnp.pad(xr, ((0, 0), (0, 0), (0, 0), (0, Tp - T)))

    # ---- freq block size: keep >= 2 reduction steps (pipelined DMA), <= ~512 KiB/block
    f_blk = 1
    for cand in range(1, F + 1):
        if (F % cand == 0
                and cand * C * Tp * xr.dtype.itemsize <= 512 * 1024
                and (F // cand >= 2 or F == 1)):
            f_blk = cand
    n_f = F // f_blk

    kern = functools.partial(
        attention2d_kernel,
        kernel_size=kernel_size, padding=padding,
        true_len=T, inv_freq=1.0 / F)

    out = pl.pallas_call(
        kern,
        out_shape=jax.ShapeDtypeStruct((B, O, Tp), jnp.float32),
        grid_spec=pltpu.PrefetchScalarGridSpec(
            num_scalar_prefetch=0,
            grid=(B, n_f),
            in_specs=[
                pl.BlockSpec((None, f_blk, C, Tp), lambda b, f: (b, f, 0, 0)),  # x
                pl.BlockSpec((kernel_size, H, C), lambda b, f: (0, 0, 0)),      # conv1d1 w (BN folded, per tap)
                pl.BlockSpec((H, 1), lambda b, f: (0, 0)),                      # conv1d1 bias (BN shift)
                pl.BlockSpec((H, H), lambda b, f: (0, 0)),                      # ContextGating weight
                pl.BlockSpec((H, 1), lambda b, f: (0, 0)),                      # ContextGating bias
                pl.BlockSpec((O, H), lambda b, f: (0, 0)),                      # conv1d2 weight / T
                pl.BlockSpec((O, 1), lambda b, f: (0, 0)),                      # conv1d2 bias / T
            ],
            out_specs=pl.BlockSpec((None, O, Tp), lambda b, f: (b, 0, 0)),
            scratch_shapes=[pltpu.VMEM((C, Tp), jnp.float32)],
        ),
        compiler_params=pltpu.CompilerParams(
            dimension_semantics=("parallel", "arbitrary")),
    )(xr, w1_taps, b1, wcg, bcg2, w2f, b2f)

    # (B, O, Tp) -> (B, O, T, 1)   (pool_dim == 'freq': unsqueeze(3))
    return out[:, :, :T, None]


def ref_attention2d_freq(x, w1, bn_gamma, bn_beta, bn_mean, bn_var, bn_eps,
                         wcg, bcg, w2, b2, *, stride, padding, temperature):
    xm = jnp.mean(x, axis=3)                                          # (B, C, T)
    y = jax.lax.conv_general_dilated(
        xm, w1, window_strides=(stride,), padding=[(padding, padding)],
        dimension_numbers=('NCH', 'OIH', 'NCH'))
    inv_std = bn_gamma / jnp.sqrt(bn_var + bn_eps)
    y = y * inv_std[None, :, None] + (bn_beta - bn_mean * inv_std)[None, :, None]
    lin = jnp.einsum('oh,bht->bot', wcg, y) + bcg[None, :, None]
    res = y * jax.nn.sigmoid(lin)
    z = jnp.einsum('oh,bht->bot', w2, res) + b2[None, :, None]
    out = jax.nn.softmax(z / temperature, axis=1)
    return out[..., None]


if __name__ == "__main__":
    # module hyperparameters (pool_dim='freq')
    in_channels, head, kernel_size = 4, 4, 3
    stride, padding, temperature, se_ratio = 1, 1, 4.0, 0.2
    hidden = max(int(in_channels * se_ratio), 4)          # -> 4
    out_channels = head * kernel_size ** 2                # -> 36

    B, C, T, F = 2, in_channels, 16, 16

    key = jax.random.PRNGKey(0)
    kx, k1, k2, k3, k4 = jax.random.split(key, 5)

    x = jax.random.normal(kx, (B, C, T, F), jnp.float32)

    # conv1d1 weight (PyTorch layout (H, C, K)), kaiming_normal fan_out/relu, no bias
    std1 = (2.0 / (hidden * kernel_size)) ** 0.5
    w1 = jax.random.normal(k1, (hidden, in_channels, kernel_size), jnp.float32) * std1

    # BatchNorm1d (inference; module's deterministic init)
    bn_eps = 1e-5
    bn_gamma = jnp.ones((hidden,), jnp.float32)
    bn_beta = jnp.zeros((hidden,), jnp.float32)
    bn_mean = jnp.zeros((hidden,), jnp.float32)
    bn_var = jnp.ones((hidden,), jnp.float32)

    # ContextGating linear: PyTorch default uniform(-1/sqrt(H), 1/sqrt(H))
    bound = 1.0 / (hidden ** 0.5)
    wcg = jax.random.uniform(k2, (hidden, hidden), jnp.float32, -bound, bound)
    bcg = jax.random.uniform(k3, (hidden,), jnp.float32, -bound, bound)

    # conv1d2: kaiming weight, zero bias (per module init)
    std2 = (2.0 / out_channels) ** 0.5
    w2 = jax.random.normal(k4, (out_channels, hidden), jnp.float32) * std2
    b2 = jnp.zeros((out_channels,), jnp.float32)

    out = attention2d_freq(
        x, w1, bn_gamma, bn_beta, bn_mean, bn_var, bn_eps, wcg, bcg, w2, b2,
        kernel_size=kernel_size, stride=stride, padding=padding,
        temperature=temperature)
    out = jax.block_until_ready(out)

    ref = ref_attention2d_freq(
        x, w1, bn_gamma, bn_beta, bn_mean, bn_var, bn_eps, wcg, bcg, w2, b2,
        stride=stride, padding=padding, temperature=temperature)
    ref = jax.block_until_ready(ref)

    assert out.shape == (B, out_channels, T, 1), out.shape
    max_err = float(jnp.max(jnp.abs(out - ref)))
    assert jnp.allclose(out, ref, atol=1e-5, rtol=1e-5), max_err
    print("KERNEL_OK")
</pallas_src>

<mosaic_0001>
module attributes {stable_mosaic.version = 11 : i64} {
  func.func @attention2d_kernel(%arg0: i32, %arg1: i32, %arg2: memref<1x8x4x128xf32, #tpu.memory_space<vmem>>, %arg3: memref<3x4x4xf32, #tpu.memory_space<vmem>>, %arg4: memref<4x1xf32, #tpu.memory_space<vmem>>, %arg5: memref<4x4xf32, #tpu.memory_space<vmem>>, %arg6: memref<4x1xf32, #tpu.memory_space<vmem>>, %arg7: memref<36x4xf32, #tpu.memory_space<vmem>>, %arg8: memref<36x1xf32, #tpu.memory_space<vmem>>, %arg9: memref<1x36x128xf32, #tpu.memory_space<vmem>>, %arg10: memref<4x128xf32, #tpu.memory_space<vmem>>) attributes {dimension_semantics = [#tpu.dimension_semantics<parallel>, #tpu.dimension_semantics<arbitrary>], iteration_bounds = array<i64: 2, 2>, scalar_prefetch = 0 : i64, scratch_operands = 1 : i64, tpu.core_type = #tpu.core_type<tc>, window_params = [{transform_indices = @transform_0, window_bounds = array<i64: 1, 8, 4, 128>}, {pipeline_mode = #tpu.pipeline_mode<synchronous>, transform_indices = @transform_1, window_bounds = array<i64: 3, 4, 4>}, {pipeline_mode = #tpu.pipeline_mode<synchronous>, transform_indices = @transform_2, window_bounds = array<i64: 4, 1>}, {pipeline_mode = #tpu.pipeline_mode<synchronous>, transform_indices = @transform_3, window_bounds = array<i64: 4, 4>}, {pipeline_mode = #tpu.pipeline_mode<synchronous>, transform_indices = @transform_4, window_bounds = array<i64: 4, 1>}, {pipeline_mode = #tpu.pipeline_mode<synchronous>, transform_indices = @transform_5, window_bounds = array<i64: 36, 4>}, {pipeline_mode = #tpu.pipeline_mode<synchronous>, transform_indices = @transform_6, window_bounds = array<i64: 36, 1>}, {transform_indices = @transform_7, window_bounds = array<i64: 1, 36, 128>}]} {
    %c0_i32 = arith.constant 0 : i32
    %0 = arith.cmpi eq, %arg1, %c0_i32 : i32
    %1 = arith.extui %0 : i1 to i32
    %c0_i32_0 = arith.constant 0 : i32
    %2 = arith.cmpi ne, %1, %c0_i32_0 : i32
    scf.if %2 {
      %cst_9 = arith.constant 0.000000e+00 : f32
      %12 = vector.broadcast %cst_9 : f32 to vector<4x128xf32>
      %c0_10 = arith.constant 0 : index
      %c0_11 = arith.constant 0 : index
      %13 = vector.load %arg10[%c0_10, %c0_11] : memref<4x128xf32, #tpu.memory_space<vmem>>, vector<4x128xf32>
      tpu.vector_store %arg10[%c0_10, %c0_11], %12 {strides = array<i32>} : memref<4x128xf32, #tpu.memory_space<vmem>>, vector<4x128xf32>,
    } else {
    }
    %c0 = arith.constant 0 : index
    %c0_1 = arith.constant 0 : index
    %3 = vector.load %arg10[%c0, %c0_1] : memref<4x128xf32, #tpu.memory_space<vmem>>, vector<4x128xf32>
    %c0_2 = arith.constant 0 : index
    %c0_3 = arith.constant 0 : index
    %c0_4 = arith.constant 0 : index
    %c0_5 = arith.constant 0 : index
    %4 = vector.load %arg2[%c0_2, %c0_3, %c0_4, %c0_5] : memref<1x8x4x128xf32, #tpu.memory_space<vmem>>, vector<1x8x4x128xf32>
    %5 = vector.shape_cast %4 : vector<1x8x4x128xf32> to vector<8x4x128xf32>
    %cst = arith.constant dense<0.000000e+00> : vector<4x128xf32>
    %6 = vector.multi_reduction <add>, %5, %cst [0] : vector<8x4x128xf32> to vector<4x128xf32>
    %7 = arith.addf %3, %6 : vector<4x128xf32>
    %c0_6 = arith.constant 0 : index
    %c0_7 = arith.constant 0 : index
    %8 = vector.load %arg10[%c0_6, %c0_7] : memref<4x128xf32, #tpu.memory_space<vmem>>, vector<4x128xf32>
    tpu.vector_store %arg10[%c0_6, %c0_7], %7 {strides = array<i32>} : memref<4x128xf32, #tpu.memory_space<vmem>>, vector<4x128xf32>,
    %c1_i32 = arith.constant 1 : i32
    %9 = arith.cmpi eq, %arg1, %c1_i32 : i32
    %10 = arith.extui %9 : i1 to i32
    %c0_i32_8 = arith.constant 0 : i32
    %11 = arith.cmpi ne, %10, %c0_i32_8 : i32
    scf.if %11 {
      %c0_9 = arith.constant 0 : index
      %c0_10 = arith.constant 0 : index
      %12 = vector.load %arg10[%c0_9, %c0_10] : memref<4x128xf32, #tpu.memory_space<vmem>>, vector<4x128xf32>
      %cst_11 = arith.constant 6.250000e-02 : f32
      %13 = vector.broadcast %cst_11 : f32 to vector<4x128xf32>
      %14 = arith.mulf %12, %13 : vector<4x128xf32>
      %15 = tpu.iota {dimensions = array<i32: 1>} : vector<4x128xi32>
      %c1_i32_12 = arith.constant 1 : i32
      %16 = tpu.dynamic_rotate %14 by %c1_i32_12 dim 1 : vector<4x128xf32>, i32 -> vector<4x128xf32>
      %c1_i32_13 = arith.constant 1 : i32
      %17 = vector.broadcast %c1_i32_13 : i32 to vector<4x128xi32>
      %18 = arith.cmpi sge, %15, %17 : vector<4x128xi32>
      %c17_i32 = arith.constant 17 : i32
      %19 = vector.broadcast %c17_i32 : i32 to vector<4x128xi32>
      %20 = arith.cmpi slt, %15, %19 : vector<4x128xi32>
      %21 = arith.andi %18, %20 : vector<4x128xi1>
      %cst_14 = arith.constant 0.000000e+00 : f32
      %22 = vector.broadcast %cst_14 : f32 to vector<4x128xf32>
      %23 = arith.select %21, %16, %22 : vector<4x128xi1>, vector<4x128xf32>
      %c0_15 = arith.constant 0 : index
      %c0_16 = arith.constant 0 : index
      %c0_17 = arith.constant 0 : index
      %24 = vector.load %arg3[%c0_15, %c0_16, %c0_17] : memref<3x4x4xf32, #tpu.memory_space<vmem>>, vector<1x4x4xf32>
      %25 = vector.shape_cast %24 : vector<1x4x4xf32> to vector<4x4xf32>
      %cst_18 = arith.constant dense<0.000000e+00> : vector<4x128xf32>
      %26 = tpu.matmul %25, %23, %cst_18 {dimension_numbers = #tpu.dot_dimension_numbers<[1], [0], [0], [1], [0, 0, 1, 1], [], []>} : vector<4x4xf32>, vector<4x128xf32>, vector<4x128xf32> -> vector<4x128xf32>
      %c1 = arith.constant 1 : index
      %c0_19 = arith.constant 0 : index
      %c0_20 = arith.constant 0 : index
      %27 = vector.load %arg3[%c1, %c0_19, %c0_20] : memref<3x4x4xf32, #tpu.memory_space<vmem>>, vector<1x4x4xf32>
      %28 = vector.shape_cast %27 : vector<1x4x4xf32> to vector<4x4xf32>
      %cst_21 = arith.constant dense<0.000000e+00> : vector<4x128xf32>
      %29 = tpu.matmul %28, %14, %cst_21 {dimension_numbers = #tpu.dot_dimension_numbers<[1], [0], [0], [1], [0, 0, 1, 1], [], []>} : vector<4x4xf32>, vector<4x128xf32>, vector<4x128xf32> -> vector<4x128xf32>
      %30 = arith.addf %26, %29 : vector<4x128xf32>
      %c127_i32 = arith.constant 127 : i32
      %31 = tpu.dynamic_rotate %14 by %c127_i32 dim 1 : vector<4x128xf32>, i32 -> vector<4x128xf32>
      %c-1_i32 = arith.constant -1 : i32
      %32 = vector.broadcast %c-1_i32 : i32 to vector<4x128xi32>
      %33 = arith.cmpi sge, %15, %32 : vector<4x128xi32>
      %c15_i32 = arith.constant 15 : i32
      %34 = vector.broadcast %c15_i32 : i32 to vector<4x128xi32>
      %35 = arith.cmpi slt, %15, %34 : vector<4x128xi32>
      %36 = arith.andi %33, %35 : vector<4x128xi1>
      %cst_22 = arith.constant 0.000000e+00 : f32
      %37 = vector.broadcast %cst_22 : f32 to vector<4x128xf32>
      %38 = arith.select %36, %31, %37 : vector<4x128xi1>, vector<4x128xf32>
      %c2 = arith.constant 2 : index
      %c0_23 = arith.constant 0 : index
      %c0_24 = arith.constant 0 : index
      %39 = vector.load %arg3[%c2, %c0_23, %c0_24] : memref<3x4x4xf32, #tpu.memory_space<vmem>>, vector<1x4x4xf32>
      %40 = vector.shape_cast %39 : vector<1x4x4xf32> to vector<4x4xf32>
      %cst_25 = arith.constant dense<0.000000e+00> : vector<4x128xf32>
      %41 = tpu.matmul %40, %38, %cst_25 {dimension_numbers = #tpu.dot_dimension_numbers<[1], [0], [0], [1], [0, 0, 1, 1], [], []>} : vector<4x4xf32>, vector<4x128xf32>, vector<4x128xf32> -> vector<4x128xf32>
      %42 = arith.addf %30, %41 : vector<4x128xf32>
      %c0_26 = arith.constant 0 : index
      %c0_27 = arith.constant 0 : index
      %43 = vector.load %arg4[%c0_26, %c0_27] : memref<4x1xf32, #tpu.memory_space<vmem>>, vector<4x1xf32>
      %44 = vector.broadcast %43 : vector<4x1xf32> to vector<4x128xf32>
      %45 = arith.addf %42, %44 : vector<4x128xf32>
      %c0_28 = arith.constant 0 : index
      %c0_29 = arith.constant 0 : index
      %46 = vector.load %arg5[%c0_28, %c0_29] : memref<4x4xf32, #tpu.memory_space<vmem>>, vector<4x4xf32>
      %cst_30 = arith.constant dense<0.000000e+00> : vector<4x128xf32>
      %47 = tpu.matmul %46, %45, %cst_30 {dimension_numbers = #tpu.dot_dimension_numbers<[1], [0], [0], [1], [0, 0, 1, 1], [], []>} : vector<4x4xf32>, vector<4x128xf32>, vector<4x128xf32> -> vector<4x128xf32>
      %c0_31 = arith.constant 0 : index
      %c0_32 = arith.constant 0 : index
      %48 = vector.load %arg6[%c0_31, %c0_32] : memref<4x1xf32, #tpu.memory_space<vmem>>, vector<4x1xf32>
      %49 = vector.broadcast %48 : vector<4x1xf32> to vector<4x128xf32>
      %50 = arith.addf %47, %49 : vector<4x128xf32>
      %51 = math.absf %50 : vector<4x128xf32>
      %cst_33 = arith.constant 0.000000e+00 : f32
      %52 = vector.broadcast %cst_33 : f32 to vector<4x128xf32>
      %53 = arith.subf %52, %51 : vector<4x128xf32>
      %54 = math.exp %53 : vector<4x128xf32>
      %cst_34 = arith.constant 1.000000e+00 : f32
      %55 = vector.broadcast %cst_34 : f32 to vector<4x128xf32>
      %56 = arith.addf %55, %54 : vector<4x128xf32>
      %cst_35 = arith.constant 1.000000e+00 : f32
      %57 = vector.broadcast %cst_35 : f32 to vector<4x128xf32>
      %58 = arith.divf %57, %56 : vector<4x128xf32>
      %cst_36 = arith.constant 0.000000e+00 : f32
      %59 = vector.broadcast %cst_36 : f32 to vector<4x128xf32>
      %60 = arith.cmpf oge, %50, %59 : vector<4x128xf32>
      %61 = arith.mulf %54, %58 : vector<4x128xf32>
      %62 = arith.select %60, %58, %61 : vector<4x128xi1>, vector<4x128xf32>
      %63 = arith.mulf %45, %62 : vector<4x128xf32>
      %c0_37 = arith.constant 0 : index
      %c0_38 = arith.constant 0 : index
      %64 = vector.load %arg7[%c0_37, %c0_38] : memref<36x4xf32, #tpu.memory_space<vmem>>, vector<36x4xf32>
      %cst_39 = arith.constant dense<0.000000e+00> : vector<36x128xf32>
      %65 = tpu.matmul %64, %63, %cst_39 {dimension_numbers = #tpu.dot_dimension_numbers<[1], [0], [0], [1], [0, 0, 1, 1], [], []>} : vector<36x4xf32>, vector<4x128xf32>, vector<36x128xf32> -> vector<36x128xf32>
      %c0_40 = arith.constant 0 : index
      %c0_41 = arith.constant 0 : index
      %66 = vector.load %arg8[%c0_40, %c0_41] : memref<36x1xf32, #tpu.memory_space<vmem>>, vector<36x1xf32>
      %67 = vector.broadcast %66 : vector<36x1xf32> to vector<36x128xf32>
      %68 = arith.addf %65, %67 : vector<36x128xf32>
      %cst_42 = arith.constant dense<0xFF800000> : vector<128xf32>
      %69 = vector.multi_reduction <maximumf>, %68, %cst_42 [0] : vector<36x128xf32> to vector<128xf32>
      %70 = vector.shape_cast %69 : vector<128xf32> to vector<1x128xf32>
      %71 = vector.broadcast %70 : vector<1x128xf32> to vector<36x128xf32>
      %72 = arith.subf %68, %71 : vector<36x128xf32>
      %73 = math.exp %72 : vector<36x128xf32>
      %cst_43 = arith.constant dense<0.000000e+00> : vector<128xf32>
      %74 = vector.multi_reduction <add>, %73, %cst_43 [0] : vector<36x128xf32> to vector<128xf32>
      %75 = vector.shape_cast %74 : vector<128xf32> to vector<1x128xf32>
      %76 = vector.broadcast %75 : vector<1x128xf32> to vector<36x128xf32>
      %77 = arith.divf %73, %76 : vector<36x128xf32>
      %c0_44 = arith.constant 0 : index
      %c0_45 = arith.constant 0 : index
      %c0_46 = arith.constant 0 : index
      %78 = vector.load %arg9[%c0_44, %c0_45, %c0_46] : memref<1x36x128xf32, #tpu.memory_space<vmem>>, vector<1x36x128xf32>
      %79 = vector.shape_cast %78 : vector<1x36x128xf32> to vector<36x128xf32>
      %80 = vector.shape_cast %77 : vector<36x128xf32> to vector<1x36x128xf32>
      tpu.vector_store %arg9[%c0_44, %c0_45, %c0_46], %80 {strides = array<i32>} : memref<1x36x128xf32, #tpu.memory_space<vmem>>, vector<1x36x128xf32>,
    } else {
    }
    return
  }
  func.func @transform_0(%arg0: i32, %arg1: i32) -> (i32, i32, i32, i32) {
    %c0_i32 = arith.constant 0 : i32
    %c0_i32_0 = arith.constant 0 : i32
    %c0_i32_1 = arith.constant 0 : i32
    return %arg0, %arg1, %c0_i32, %c0_i32_0 : i32, i32, i32, i32
  }
  func.func @transform_1(%arg0: i32, %arg1: i32) -> (i32, i32, i32) {
    %c0_i32 = arith.constant 0 : i32
    %c0_i32_0 = arith.constant 0 : i32
    %c0_i32_1 = arith.constant 0 : i32
    %c0_i32_2 = arith.constant 0 : i32
    return %c0_i32, %c0_i32_0, %c0_i32_1 : i32, i32, i32
  }
  func.func @transform_2(%arg0: i32, %arg1: i32) -> (i32, i32) {
    %c0_i32 = arith.constant 0 : i32
    %c0_i32_0 = arith.constant 0 : i32
    %c0_i32_1 = arith.constant 0 : i32
    return %c0_i32, %c0_i32_0 : i32, i32
  }
  func.func @transform_3(%arg0: i32, %arg1: i32) -> (i32, i32) {
    %c0_i32 = arith.constant 0 : i32
    %c0_i32_0 = arith.constant 0 : i32
    %c0_i32_1 = arith.constant 0 : i32
    return %c0_i32, %c0_i32_0 : i32, i32
  }
  func.func @transform_4(%arg0: i32, %arg1: i32) -> (i32, i32) {
    %c0_i32 = arith.constant 0 : i32
    %c0_i32_0 = arith.constant 0 : i32
    %c0_i32_1 = arith.constant 0 : i32
    return %c0_i32, %c0_i32_0 : i32, i32
  }
  func.func @transform_5(%arg0: i32, %arg1: i32) -> (i32, i32) {
    %c0_i32 = arith.constant 0 : i32
    %c0_i32_0 = arith.constant 0 : i32
    %c0_i32_1 = arith.constant 0 : i32
    return %c0_i32, %c0_i32_0 : i32, i32
  }
  func.func @transform_6(%arg0: i32, %arg1: i32) -> (i32, i32) {
    %c0_i32 = arith.constant 0 : i32
    %c0_i32_0 = arith.constant 0 : i32
    %c0_i32_1 = arith.constant 0 : i32
    return %c0_i32, %c0_i32_0 : i32, i32
  }
  func.func @transform_7(%arg0: i32, %arg1: i32) -> (i32, i32, i32) {
    %c0_i32 = arith.constant 0 : i32
    %c0_i32_0 = arith.constant 0 : i32
    %c0_i32_1 = arith.constant 0 : i32
    return %arg0, %c0_i32, %c0_i32_0 : i32, i32, i32
  }
}

</mosaic_0001>

<llo_original>
// kernel: tpu_custom_call.1
$region0: #{tpu_custom_call.1}
  #allocation0 [shape = 'u32[]', space=smem, size = 0x4, offset = 0x4, fixed_abs, tag = 'smem constant byte address 0x4 - core index']
  #allocation1 [shape = 'u32[144,128]{1,0:T(1,128)}', space=vmem, size = 0x12000, scoped, tag = 'internal scratch']
  #allocation2 [shape = 'f32[4,128]{1,0:T(4,128)}', space=vmem, size = 0x800, scoped, tag = 'scratch operand']
  %s0 = inlined_call_operand.hbm [shape: f32[2,16,4,128], index: 0, kind: input, shape index: {}]
  %s1 = inlined_call_operand.vmem [shape: f32[3,4,4], index: 1, kind: input, shape index: {}]
  %s2 = inlined_call_operand.vmem [shape: f32[4,1], index: 2, kind: input, shape index: {}]
  %s3 = inlined_call_operand.vmem [shape: f32[4,4], index: 3, kind: input, shape index: {}]
  %s4 = inlined_call_operand.vmem [shape: f32[4,1], index: 4, kind: input, shape index: {}]
  %s5 = inlined_call_operand.vmem [shape: f32[36,4], index: 5, kind: input, shape index: {}]
  %s6 = inlined_call_operand.vmem [shape: f32[36,1], index: 6, kind: input, shape index: {}]
  %s7 = inlined_call_operand.vmem [shape: f32[2,36,128], index: 7, kind: output, shape index: {}]
  %s8 = sld [smem:[#allocation0]]
  $region73: #{tpu_custom_call.1} parent=0
    _
  %s10 = ssub.s32 1, %s8
  %s11 = scalar_select 0, %s10, %s8
  $region1: #{tpu_custom_call.1} parent=0
    #allocation3 [shape = 'u8[32768]{0}', space=vmem, size = 0x8000, scoped, tag = 'input window, operand 0']
    #allocation4 [shape = 's32[2]{0}', space=sflag, size = 0x8, scoped, tag = 'scoped memory for tpu_custom_call.1']
    %12 = vsyncpa [#allocation4], 0
    %s13 = scalar_lea.sflag [#allocation4], 1
    %14 = vsyncpa %s13, 0
    loop: start=0, step=1, limit=6
    $region2: #{tpu_custom_call.1} parent=1 // loop_pre_header
      _
    $region3: #{tpu_custom_call.1} parent=1 // loop_header
      %s16 = sphi 0, %s20
      %p17 = scmp.ge.s32.totalorder %s16, 6
      %s23 = sphi 0, %s35
      %s24 = sphi 0, %s31
      %s25 = sphi 0, %s23
      %s26 = sphi 0, %s24
      %s27 = sphi 0, %s25
      %s28 = sphi 0, %s26
      %s40 = sphi 0, %s42
      %s43 = sphi 0, %s40
      %s44 = sphi 0, %s43
      %s60 = sphi 0, %s44
      %s64 = sphi 0, %s64
      %s66 = sphi 0, %s64
      %s67 = sphi 0, %s66
      %s81 = sphi 0, %s67
      %s85 = sphi 0, %s85
      %s87 = sphi 0, %s85
      %s88 = sphi 0, %s87
      %s102 = sphi 0, %s88
      %s106 = sphi 0, %s106
      %s108 = sphi 0, %s106
      %s109 = sphi 0, %s108
      %s123 = sphi 0, %s109
      %s127 = sphi 0, %s127
      %s129 = sphi 0, %s127
      %s130 = sphi 0, %s129
      %s144 = sphi 0, %s130
      %s148 = sphi 0, %s148
      %s150 = sphi 0, %s148
      %s151 = sphi 0, %s150
      %s165 = sphi 0, %s151
      %s169 = sphi 0, %s169
      %s171 = sphi 0, %s169
      %s172 = sphi 0, %s171
      %s186 = sphi 0, %s172
      %s192 = sphi 0, %s194
      %s195 = sphi 0, %s192
      %s196 = sphi 0, %s195
      %s212 = sphi 0, %s196
    $region4: #{tpu_custom_call.1} parent=1 // loop_header_branch
      %19 = sbr.rel (%p17) target = $region8
    $region5: #{tpu_custom_call.1} parent=1 // loop_body
      %s21 = ssub.s32 %s16, 1
      %s22 = ssub.s32 %s16, 2
      %s29 = sadd.s32 1, %s24
      %p30 = scmp.ge.s32.totalorder %s29, 2
      %s31 = scalar_select %p30, 0, %s29
      %s32 = sadd.s32 1, %s23
      %s33 = scalar_select %p30, %s32, %s23
      %p34 = scmp.ge.s32.totalorder %s33, 2
      %s35 = scalar_select %p34, 0, %s33
      %s36 = ssub.s32 %s23, %s35
      %s37 = ssub.s32 %s24, %s31
      %s38 = sor.u32 %s36, %s37
      %p39 = scmp.eq.s32.totalorder %s38, 0
      %s41 = sadd.s32 %s40, 1
      %s42 = scalar_select %p39, %s40, %s41
      %p45 = pneg %p39
      %p46 = scmp.eq.s32.totalorder %s16, 3
      %p47 = por %p45, %p46
      %p48 = scmp.ne.s32.totalorder %s40, %s43
      %p49 = scmp.eq.s32.totalorder %s16, 0
      %p50 = por %p48, %p49
      %p51 = scmp.ne.s32.totalorder %s40, %s43
      %p52 = scmp.eq.s32.totalorder %s21, 3
      %p53 = por %p51, %p52
      %p54 = scmp.ne.s32.totalorder %s43, %s44
      %p55 = scmp.eq.s32.totalorder %s21, 0
      %p56 = por %p54, %p55
      %p57 = scmp.ne.s32.totalorder %s43, %s44
      %p58 = scmp.eq.s32.totalorder %s22, 3
      %p59 = por %p57, %p58
      %p61 = scmp.ne.s32.totalorder %s44, %s60
      %p62 = scmp.eq.s32.totalorder %s22, 0
      %p63 = por %p61, %p62
      %s65 = sadd.s32 %s64, 1
      %p68 = scmp.eq.s32.totalorder %s16, 3
      %p69 = scmp.ne.s32.totalorder %s64, %s66
      %p70 = scmp.eq.s32.totalorder %s16, 0
      %p71 = por %p69, %p70
      %p72 = scmp.ne.s32.totalorder %s64, %s66
      %p73 = scmp.eq.s32.totalorder %s21, 3
      %p74 = por %p72, %p73
      %p75 = scmp.ne.s32.totalorder %s66, %s67
      %p76 = scmp.eq.s32.totalorder %s21, 0
      %p77 = por %p75, %p76
      %p78 = scmp.ne.s32.totalorder %s66, %s67
      %p79 = scmp.eq.s32.totalorder %s22, 3
      %p80 = por %p78, %p79
      %p82 = scmp.ne.s32.totalorder %s67, %s81
      %p83 = scmp.eq.s32.totalorder %s22, 0
      %p84 = por %p82, %p83
      %s86 = sadd.s32 %s85, 1
      %p89 = scmp.eq.s32.totalorder %s16, 3
      %p90 = scmp.ne.s32.totalorder %s85, %s87
      %p91 = scmp.eq.s32.totalorder %s16, 0
      %p92 = por %p90, %p91
      %p93 = scmp.ne.s32.totalorder %s85, %s87
      %p94 = scmp.eq.s32.totalorder %s21, 3
      %p95 = por %p93, %p94
      %p96 = scmp.ne.s32.totalorder %s87, %s88
      %p97 = scmp.eq.s32.totalorder %s21, 0
      %p98 = por %p96, %p97
      %p99 = scmp.ne.s32.totalorder %s87, %s88
      %p100 = scmp.eq.s32.totalorder %s22, 3
      %p101 = por %p99, %p100
      %p103 = scmp.ne.s32.totalorder %s88, %s102
      %p104 = scmp.eq.s32.totalorder %s22, 0
      %p105 = por %p103, %p104
      %s107 = sadd.s32 %s106, 1
      %p110 = scmp.eq.s32.totalorder %s16, 3
      %p111 = scmp.ne.s32.totalorder %s106, %s108
      %p112 = scmp.eq.s32.totalorder %s16, 0
      %p113 = por %p111, %p112
      %p114 = scmp.ne.s32.totalorder %s106, %s108
      %p115 = scmp.eq.s32.totalorder %s21, 3
      %p116 = por %p114, %p115
      %p117 = scmp.ne.s32.totalorder %s108, %s109
      %p118 = scmp.eq.s32.totalorder %s21, 0
      %p119 = por %p117, %p118
      %p120 = scmp.ne.s32.totalorder %s108, %s109
      %p121 = scmp.eq.s32.totalorder %s22, 3
      %p122 = por %p120, %p121
      %p124 = scmp.ne.s32.totalorder %s109, %s123
      %p125 = scmp.eq.s32.totalorder %s22, 0
      %p126 = por %p124, %p125
      %s128 = sadd.s32 %s127, 1
      %p131 = scmp.eq.s32.totalorder %s16, 3
      %p132 = scmp.ne.s32.totalorder %s127, %s129
      %p133 = scmp.eq.s32.totalorder %s16, 0
      %p134 = por %p132, %p133
      %p135 = scmp.ne.s32.totalorder %s127, %s129
      %p136 = scmp.eq.s32.totalorder %s21, 3
      %p137 = por %p135, %p136
      %p138 = scmp.ne.s32.totalorder %s129, %s130
      %p139 = scmp.eq.s32.totalorder %s21, 0
      %p140 = por %p138, %p139
      %p141 = scmp.ne.s32.totalorder %s129, %s130
      %p142 = scmp.eq.s32.totalorder %s22, 3
      %p143 = por %p141, %p142
      %p145 = scmp.ne.s32.totalorder %s130, %s144
      %p146 = scmp.eq.s32.totalorder %s22, 0
      %p147 = por %p145, %p146
      %s149 = sadd.s32 %s148, 1
      %p152 = scmp.eq.s32.totalorder %s16, 3
      %p153 = scmp.ne.s32.totalorder %s148, %s150
      %p154 = scmp.eq.s32.totalorder %s16, 0
      %p155 = por %p153, %p154
      %p156 = scmp.ne.s32.totalorder %s148, %s150
      %p157 = scmp.eq.s32.totalorder %s21, 3
      %p158 = por %p156, %p157
      %p159 = scmp.ne.s32.totalorder %s150, %s151
      %p160 = scmp.eq.s32.totalorder %s21, 0
      %p161 = por %p159, %p160
      %p162 = scmp.ne.s32.totalorder %s150, %s151
      %p163 = scmp.eq.s32.totalorder %s22, 3
      %p164 = por %p162, %p163
      %p166 = scmp.ne.s32.totalorder %s151, %s165
      %p167 = scmp.eq.s32.totalorder %s22, 0
      %p168 = por %p166, %p167
      %s170 = sadd.s32 %s169, 1
      %p173 = scmp.eq.s32.totalorder %s16, 3
      %p174 = scmp.ne.s32.totalorder %s169, %s171
      %p175 = scmp.eq.s32.totalorder %s16, 0
      %p176 = por %p174, %p175
      %p177 = scmp.ne.s32.totalorder %s169, %s171
      %p178 = scmp.eq.s32.totalorder %s21, 3
      %p179 = por %p177, %p178
      %p180 = scmp.ne.s32.totalorder %s171, %s172
      %p181 = scmp.eq.s32.totalorder %s21, 0
      %p182 = por %p180, %p181
      %p183 = scmp.ne.s32.totalorder %s171, %s172
      %p184 = scmp.eq.s32.totalorder %s22, 3
      %p185 = por %p183, %p184
      %p187 = scmp.ne.s32.totalorder %s172, %s186
      %p188 = scmp.eq.s32.totalorder %s22, 0
      %p189 = por %p187, %p188
      %s190 = ssub.s32 %s23, %s35
      %p191 = scmp.eq.s32.totalorder %s190, 0
      %s193 = sadd.s32 %s192, 1
      %s194 = scalar_select %p191, %s192, %s193
      %p197 = pneg %p191
      %p198 = scmp.eq.s32.totalorder %s16, 3
      %p199 = por %p197, %p198
      %p200 = scmp.ne.s32.totalorder %s192, %s195
      %p201 = scmp.eq.s32.totalorder %s16, 0
      %p202 = por %p200, %p201
      %p203 = scmp.ne.s32.totalorder %s192, %s195
      %p204 = scmp.eq.s32.totalorder %s21, 3
      %p205 = por %p203, %p204
      %p206 = scmp.ne.s32.totalorder %s195, %s196
      %p207 = scmp.eq.s32.totalorder %s21, 0
      %p208 = por %p206, %p207
      %p209 = scmp.ne.s32.totalorder %s195, %s196
      %p210 = scmp.eq.s32.totalorder %s22, 3
      %p211 = por %p209, %p210
      %p213 = scmp.ne.s32.totalorder %s196, %s212
      %p214 = scmp.eq.s32.totalorder %s22, 0
      %p215 = por %p213, %p214
      %p216 = scmp.le.s32.totalorder 1, %s16
      %p217 = scmp.lt.s32.totalorder %s16, 5
      %p218 = pnand %p216, %p217
      %p219 = pneg %p218
      // Predicated region
      $region9: #{tpu_custom_call.1} parent=5 // pred_check
        _
      $region10: #{tpu_custom_call.1} parent=5 // pred_check_branch
        %221 = sbr.rel (%p218) target = $region12
      $region11: #{tpu_custom_call.1} parent=5 // pred_region
        %s222 = ssub.s32 %s16, 1
        // Predicated region
        $region13: #{tpu_custom_call.1} parent=11 // pred_check
          %p223 = pneg %p77
        $region14: #{tpu_custom_call.1} parent=11 // pred_check_branch
          %225 = sbr.rel (%p223) target = $region16
        $region15: #{tpu_custom_call.1} parent=11 // pred_region
          _
        $region16: #{tpu_custom_call.1} parent=11 // pred_fallthru
          _
        // Predicated region
        $region17: #{tpu_custom_call.1} parent=11 // pred_check
          %p226 = pneg %p98
        $region18: #{tpu_custom_call.1} parent=11 // pred_check_branch
          %228 = sbr.rel (%p226) target = $region20
        $region19: #{tpu_custom_call.1} parent=11 // pred_region
          _
        $region20: #{tpu_custom_call.1} parent=11 // pred_fallthru
          _
        // Predicated region
        $region21: #{tpu_custom_call.1} parent=11 // pred_check
          %p229 = pneg %p119
        $region22: #{tpu_custom_call.1} parent=11 // pred_check_branch
          %231 = sbr.rel (%p229) target = $region24
        $region23: #{tpu_custom_call.1} parent=11 // pred_region
          _
        $region24: #{tpu_custom_call.1} parent=11 // pred_fallthru
          _
        // Predicated region
        $region25: #{tpu_custom_call.1} parent=11 // pred_check
          %p232 = pneg %p140
        $region26: #{tpu_custom_call.1} parent=11 // pred_check_branch
          %234 = sbr.rel (%p232) target = $region28
        $region27: #{tpu_custom_call.1} parent=11 // pred_region
          _
        $region28: #{tpu_custom_call.1} parent=11 // pred_fallthru
          _
        // Predicated region
        $region29: #{tpu_custom_call.1} parent=11 // pred_check
          %p235 = pneg %p161
        $region30: #{tpu_custom_call.1} parent=11 // pred_check_branch
          %237 = sbr.rel (%p235) target = $region32
        $region31: #{tpu_custom_call.1} parent=11 // pred_region
          _
        $region32: #{tpu_custom_call.1} parent=11 // pred_fallthru
          _
        // Predicated region
        $region33: #{tpu_custom_call.1} parent=11 // pred_check
          %p238 = pneg %p182
        $region34: #{tpu_custom_call.1} parent=11 // pred_check_branch
          %240 = sbr.rel (%p238) target = $region36
        $region35: #{tpu_custom_call.1} parent=11 // pred_region
          _
        $region36: #{tpu_custom_call.1} parent=11 // pred_fallthru
          _
      $region12: #{tpu_custom_call.1} parent=5 // pred_fallthru
        _
      %p241 = scmp.lt.s32.totalorder %s16, 4
      // Predicated region
      $region37: #{tpu_custom_call.1} parent=5 // pred_check
        %p242 = pneg %p241
      $region38: #{tpu_custom_call.1} parent=5 // pred_check_branch
        %244 = sbr.rel (%p242) target = $region40
      $region39: #{tpu_custom_call.1} parent=5 // pred_region
        // Predicated region
        $region41: #{tpu_custom_call.1} parent=39 // pred_check
          %p245 = pneg %p50
        $region42: #{tpu_custom_call.1} parent=39 // pred_check_branch
          %247 = sbr.rel (%p245) target = $region44
        $region43: #{tpu_custom_call.1} parent=39 // pred_region
          %s248 = sand.u32 %s40, 1
          %s249 = scalar_lea.sflag [#allocation4], %s248
          %s250 = sand.u32 %s40, 1
          %s251 = smul.addr %s250, 32
          %s252 = scalar_lea.vmem [#allocation3], %s251
          %s253 = smul.u32 8, %s24
          %s255 = ssub.s32 512, 512
          %256 = vsyncadd %s249, %s255
          %s257 = smul.addr %s23, 16
          %s258 = sadd.s32 %s253, %s257
          %s259 = smul.addr %s258, 64
          %s260 = scalar_lea.hbm %s0, %s259
          %s261 = sshll.u32 %s252, 4
          %s262 = int_to_ptr.vmem [resolvable:$true] %s261
          %267 = dma.hbm_to_vmem [thread:$0]  %s260, 512, %s262, %s249, 64, 64, 4
        $region44: #{tpu_custom_call.1} parent=39 // pred_fallthru
          _
      $region40: #{tpu_custom_call.1} parent=5 // pred_fallthru
        _
      %p268 = scmp.le.s32.totalorder 1, %s16
      %p269 = scmp.lt.s32.totalorder %s16, 5
      %p270 = pnand %p268, %p269
      %p271 = pneg %p270
      // Predicated region
      $region45: #{tpu_custom_call.1} parent=5 // pred_check
        _
      $region46: #{tpu_custom_call.1} parent=5 // pred_check_branch
        %273 = sbr.rel (%p270) target = $region48
      $region47: #{tpu_custom_call.1} parent=5 // pred_region
        %s274 = ssub.s32 %s16, 1
        %s275 = sand.u32 %s43, 1
        %s276 = scalar_lea.sflag [#allocation4], %s275
        %s277 = sand.u32 %s43, 1
        %s278 = smul.addr %s277, 32
        %s279 = scalar_lea.vmem [#allocation3], %s278
        // Predicated region
        $region49: #{tpu_custom_call.1} parent=47 // pred_check
          %p280 = pneg %p56
        $region50: #{tpu_custom_call.1} parent=47 // pred_check_branch
          %282 = sbr.rel (%p280) target = $region52
        $region51: #{tpu_custom_call.1} parent=47 // pred_region
          %283 = dma.done %s276, 512
        $region52: #{tpu_custom_call.1} parent=47 // pred_fallthru
          _
        %s284 = sand.u32 %s43, 1
        %s285 = scalar_lea.sflag [#allocation4], %s284
        %s286 = sand.u32 %s43, 1
        %s287 = smul.addr %s286, 32
        %s288 = scalar_lea.vmem [#allocation3], %s287
        %p289 = pneg %p56
        %p290 = pneg %p53
        %p291 = pneg %p77
        %p292 = pneg %p74
        %p293 = pneg %p98
        %p294 = pneg %p95
        %p295 = pneg %p119
        %p296 = pneg %p116
        %p297 = pneg %p140
        %p298 = pneg %p137
        %p299 = pneg %p161
        %p300 = pneg %p158
        %p301 = pneg %p182
        %p302 = pneg %p179
        %p303 = pneg %p208
        %p304 = pneg %p205
        %p305 = scmp.lt.s32.totalorder %s25, 1
        %s306 = scalar_select %p305, %s25, 1
        %s307 = smul.addr %s306, 5
        %s308 = smul.addr %s307, 8
        %s309 = scalar_lea.vmem %s7, %s308
        %s310 = smul.u32 8, %s26
        %p311 = scmp.lt.s32.totalorder %s25, 1
        %s312 = scalar_select %p311, %s25, 1
        %s313 = smul.addr %s312, 5
        %s314 = smul.addr %s313, 8
        %s315 = scalar_lea.vmem %s7, %s314
        %p316 = scmp.eq.s32.totalorder %s26, 0
        // Predicated region
        $region53: #{tpu_custom_call.1} parent=47 // pred_check
          %p317 = pneg %p316
        $region54: #{tpu_custom_call.1} parent=47 // pred_check_branch
          %319 = sbr.rel (%p317) target = $region56
        $region55: #{tpu_custom_call.1} parent=47 // pred_region
          %320 = vst [vmem:[#allocation2] sm:$0xf] 0.0
        $region56: #{tpu_custom_call.1} parent=47 // pred_fallthru
          _
        %v321 = vld [vmem:[#allocation2] sm:$0xf]
        %v322 = vld [vmem:[%s279] sm:$0xf]
        %v323 = vld [vmem:[%s279 + $0x4] sm:$0xf]
        %v324 = vld [vmem:[%s279 + $0x8] sm:$0xf]
        %v325 = vld [vmem:[%s279 + $0xc] sm:$0xf]
        %v326 = vld [vmem:[%s279 + $0x10] sm:$0xf]
        %v327 = vld [vmem:[%s279 + $0x14] sm:$0xf]
        %v328 = vld [vmem:[%s279 + $0x18] sm:$0xf]
        %v329 = vld [vmem:[%s279 + $0x1c] sm:$0xf]
        %vm330 = vcmask 1043456
        %v331 = vsel %vm330, %v322, 0.0
        %v332 = vsel %vm330, %v323, 0.0
        %v333 = vadd.f32 %v331, %v332
        %v334 = vsel %vm330, %v324, 0.0
        %v335 = vadd.f32 %v333, %v334
        %v336 = vsel %vm330, %v325, 0.0
        %v337 = vadd.f32 %v335, %v336
        %v338 = vsel %vm330, %v326, 0.0
        %v339 = vadd.f32 %v337, %v338
        %v340 = vsel %vm330, %v327, 0.0
        %v341 = vadd.f32 %v339, %v340
        %v342 = vsel %vm330, %v328, 0.0
        %v343 = vadd.f32 %v341, %v342
        %v344 = vsel %vm330, %v329, 0.0
        %v345 = vadd.f32 %v343, %v344
        %v346 = vadd.f32 %v321, %v345
        %347 = vst [vmem:[#allocation2] sm:$0xf] %v346
        %p348 = scmp.eq.s32.totalorder %s26, 1
        // Predicated region
        $region57: #{tpu_custom_call.1} parent=47 // pred_check
          %p349 = pneg %p348
        $region58: #{tpu_custom_call.1} parent=47 // pred_check_branch
          %351 = sbr.rel (%p349) target = $region60
        $region59: #{tpu_custom_call.1} parent=47 // pred_region
          %v352 = vld [vmem:[#allocation2] sm:$0xf]
          %v353 = vmul.f32 %v352, 0.0625
          %v354 = vlaneseq
          %v355 = vand.u32 %v354, 127
          %356 = vrot.lane.b32.xlu0 %v353, 1
          %v357 = vpop.permute.xlu0 %356
          %vm358 = vcmp.ge.s32.totalorder %v355, 1
          %vm359 = vcmp.lt.s32.totalorder %v355, 17
          %vm360 = vmand %vm358, %vm359
          %v361 = vsel %vm360, %v357, 0.0
          %v362 = vld [vmem:[%s1] sm:$0xf]
          %s363 = scalar_lea.vmem %s1, 4
          %v364 = vld [vmem:[%s363] sm:$0xf]
          %vm365 = vcmask 31744
          %v367 = vsel %vm365, %v364, 0
          %v370 = vsel %vm330, %v353, 0
          %372 = vmatprep.subr.mxu0 0.0
          %373 = vmatpush1.msra.mxu0 0.0
          %374 = vmatprep.subr.mxu0 0.0
          %375 = vmatpush1.msra.mxu0 0.0
          %376 = vmatprep.subr.mxu0 0.0
          %377 = vmatpush1.msra.mxu0 0.0
          %378 = vmatprep.subr.mxu0 0.0
          %379 = vmatpush1.msra.mxu0 0.0
          %380 = vmatprep.subr.mxu0 0.0
          %381 = vmatpush1.msra.mxu0 0.0
          %382 = vmatprep.subr.mxu0 0.0
          %383 = vmatpush1.msra.mxu0 0.0
          %384 = vmatprep.subr.mxu0 0.0
          %385 = vmatpush1.msra.mxu0 0.0
          %386 = vmatprep.subr.mxu0 0.0
          %387 = vmatpush1.msra.mxu0 0.0
          %388 = vmatprep.subr.mxu0 0.0
          %389 = vmatpush1.msra.mxu0 0.0
          %390 = vmatprep.subr.mxu0 0.0
          %391 = vmatpush1.msra.mxu0 0.0
          %392 = vmatprep.subr.mxu0 0.0
          %393 = vmatpush1.msra.mxu0 0.0
          %394 = vmatprep.subr.mxu0 0.0
          %395 = vmatpush1.msra.mxu0 0.0
          %396 = vmatprep.subr.mxu0 0.0
          %397 = vmatpush1.msra.mxu0 0.0
          %398 = vmatprep.subr.mxu0 0.0
          %399 = vmatpush1.msra.mxu0 0.0
          %400 = vmatprep.subr.mxu0 0.0
          %401 = vmatpush1.msra.mxu0 0.0
          %402 = vmatprep.subr.mxu0 0.0
          %403 = vmatpush1.msra.mxu0 %v370
          %404 = vmatprep.subr.mxu0 0.0
          %405 = vmatpush2.msra.mxu0 0.0
          %406 = vmatprep.subr.mxu0 0.0
          %407 = vmatpush2.msra.mxu0 0.0
          %408 = vmatprep.subr.mxu0 0.0
          %409 = vmatpush2.msra.mxu0 0.0
          %410 = vmatprep.subr.mxu0 0.0
          %411 = vmatpush2.msra.mxu0 0.0
          %412 = vmatprep.subr.mxu0 0.0
          %413 = vmatpush2.msra.mxu0 0.0
          %414 = vmatprep.subr.mxu0 0.0
          %415 = vmatpush2.msra.mxu0 0.0
          %416 = vmatprep.subr.mxu0 0.0
          %417 = vmatpush2.msra.mxu0 0.0
          %418 = vmatprep.subr.mxu0 0.0
          %419 = vmatpush2.msra.mxu0 0.0
          %420 = vmatprep.subr.mxu0 0.0
          %421 = vmatpush2.msra.mxu0 0.0
          %422 = vmatprep.subr.mxu0 0.0
          %423 = vmatpush2.msra.mxu0 0.0
          %424 = vmatprep.subr.mxu0 0.0
          %425 = vmatpush2.msra.mxu0 0.0
          %426 = vmatprep.subr.mxu0 0.0
          %427 = vmatpush2.msra.mxu0 0.0
          %428 = vmatprep.subr.mxu0 0.0
          %429 = vmatpush2.msra.mxu0 0.0
          %430 = vmatprep.subr.mxu0 0.0
          %431 = vmatpush2.msra.mxu0 0.0
          %432 = vmatprep.subr.mxu0 0.0
          %433 = vmatpush2.msra.mxu0 0.0
          %434 = vmatprep.subr.mxu0 0.0
          %435 = vmatpush2.msra.mxu0 0.0
          %436 = vmatprep.mubr.f32.mxu0 0.0
          %437 = vmatmul.mubr.f32.gmra.mxu0 %v367
          %v438 = vpop.f32.mrf.mxu0
          %v439 = vadd.f32 0.0, %v438
          %v440 = vpop.f32.mrf.mxu0
          %441 = vdwg.mxu0
          %v443 = vsel %vm365, %v362, 0
          %v446 = vsel %vm330, %v361, 0
          %448 = vmatprep.subr.mxu0 0.0
          %449 = vmatpush1.msra.mxu0 0.0
          %450 = vmatprep.subr.mxu0 0.0
          %451 = vmatpush1.msra.mxu0 0.0
          %452 = vmatprep.subr.mxu0 0.0
          %453 = vmatpush1.msra.mxu0 0.0
          %454 = vmatprep.subr.mxu0 0.0
          %455 = vmatpush1.msra.mxu0 0.0
          %456 = vmatprep.subr.mxu0 0.0
          %457 = vmatpush1.msra.mxu0 0.0
          %458 = vmatprep.subr.mxu0 0.0
          %459 = vmatpush1.msra.mxu0 0.0
          %460 = vmatprep.subr.mxu0 0.0
          %461 = vmatpush1.msra.mxu0 0.0
          %462 = vmatprep.subr.mxu0 0.0
          %463 = vmatpush1.msra.mxu0 0.0
          %464 = vmatprep.subr.mxu0 0.0
          %465 = vmatpush1.msra.mxu0 0.0
          %466 = vmatprep.subr.mxu0 0.0
          %467 = vmatpush1.msra.mxu0 0.0
          %468 = vmatprep.subr.mxu0 0.0
          %469 = vmatpush1.msra.mxu0 0.0
          %470 = vmatprep.subr.mxu0 0.0
          %471 = vmatpush1.msra.mxu0 0.0
          %472 = vmatprep.subr.mxu0 0.0
          %473 = vmatpush1.msra.mxu0 0.0
          %474 = vmatprep.subr.mxu0 0.0
          %475 = vmatpush1.msra.mxu0 0.0
          %476 = vmatprep.subr.mxu0 0.0
          %477 = vmatpush1.msra.mxu0 0.0
          %478 = vmatprep.subr.mxu0 0.0
          %479 = vmatpush1.msra.mxu0 %v446
          %480 = vmatprep.subr.mxu0 0.0
          %481 = vmatpush2.msra.mxu0 0.0
          %482 = vmatprep.subr.mxu0 0.0
          %483 = vmatpush2.msra.mxu0 0.0
          %484 = vmatprep.subr.mxu0 0.0
          %485 = vmatpush2.msra.mxu0 0.0
          %486 = vmatprep.subr.mxu0 0.0
          %487 = vmatpush2.msra.mxu0 0.0
          %488 = vmatprep.subr.mxu0 0.0
          %489 = vmatpush2.msra.mxu0 0.0
          %490 = vmatprep.subr.mxu0 0.0
          %491 = vmatpush2.msra.mxu0 0.0
          %492 = vmatprep.subr.mxu0 0.0
          %493 = vmatpush2.msra.mxu0 0.0
          %494 = vmatprep.subr.mxu0 0.0
          %495 = vmatpush2.msra.mxu0 0.0
          %496 = vmatprep.subr.mxu0 0.0
          %497 = vmatpush2.msra.mxu0 0.0
          %498 = vmatprep.subr.mxu0 0.0
          %499 = vmatpush2.msra.mxu0 0.0
          %500 = vmatprep.subr.mxu0 0.0
          %501 = vmatpush2.msra.mxu0 0.0
          %502 = vmatprep.subr.mxu0 0.0
          %503 = vmatpush2.msra.mxu0 0.0
          %504 = vmatprep.subr.mxu0 0.0
          %505 = vmatpush2.msra.mxu0 0.0
          %506 = vmatprep.subr.mxu0 0.0
          %507 = vmatpush2.msra.mxu0 0.0
          %508 = vmatprep.subr.mxu0 0.0
          %509 = vmatpush2.msra.mxu0 0.0
          %510 = vmatprep.subr.mxu0 0.0
          %511 = vmatpush2.msra.mxu0 0.0
          %512 = vmatprep.mubr.f32.mxu0 0.0
          %513 = vmatmul.mubr.f32.gmra.mxu0 %v443
          %v514 = vpop.f32.mrf.mxu0
          %v515 = vadd.f32 %v439, %v514
          %v516 = vpop.f32.mrf.mxu0
          %517 = vdwg.mxu0
          %518 = vrot.lane.b32.xlu0 %v353, 127
          %v519 = vpop.permute.xlu0 %518
          %vm520 = vcmp.ge.s32.totalorder %v355, 4294967295
          %vm521 = vcmp.lt.s32.totalorder %v355, 15
          %vm522 = vmand %vm520, %vm521
          %v523 = vsel %vm522, %v519, 0.0
          %s524 = scalar_lea.vmem %s1, 8
          %v525 = vld [vmem:[%s524] sm:$0xf]
          %v527 = vsel %vm365, %v525, 0
          %v530 = vsel %vm330, %v523, 0
          %532 = vmatprep.subr.mxu0 0.0
          %533 = vmatpush1.msra.mxu0 0.0
          %534 = vmatprep.subr.mxu0 0.0
          %535 = vmatpush1.msra.mxu0 0.0
          %536 = vmatprep.subr.mxu0 0.0
          %537 = vmatpush1.msra.mxu0 0.0
          %538 = vmatprep.subr.mxu0 0.0
          %539 = vmatpush1.msra.mxu0 0.0
          %540 = vmatprep.subr.mxu0 0.0
          %541 = vmatpush1.msra.mxu0 0.0
          %542 = vmatprep.subr.mxu0 0.0
          %543 = vmatpush1.msra.mxu0 0.0
          %544 = vmatprep.subr.mxu0 0.0
          %545 = vmatpush1.msra.mxu0 0.0
          %546 = vmatprep.subr.mxu0 0.0
          %547 = vmatpush1.msra.mxu0 0.0
          %548 = vmatprep.subr.mxu0 0.0
          %549 = vmatpush1.msra.mxu0 0.0
          %550 = vmatprep.subr.mxu0 0.0
          %551 = vmatpush1.msra.mxu0 0.0
          %552 = vmatprep.subr.mxu0 0.0
          %553 = vmatpush1.msra.mxu0 0.0
          %554 = vmatprep.subr.mxu0 0.0
          %555 = vmatpush1.msra.mxu0 0.0
          %556 = vmatprep.subr.mxu0 0.0
          %557 = vmatpush1.msra.mxu0 0.0
          %558 = vmatprep.subr.mxu0 0.0
          %559 = vmatpush1.msra.mxu0 0.0
          %560 = vmatprep.subr.mxu0 0.0
          %561 = vmatpush1.msra.mxu0 0.0
          %562 = vmatprep.subr.mxu0 0.0
          %563 = vmatpush1.msra.mxu0 %v530
          %564 = vmatprep.subr.mxu0 0.0
          %565 = vmatpush2.msra.mxu0 0.0
          %566 = vmatprep.subr.mxu0 0.0
          %567 = vmatpush2.msra.mxu0 0.0
          %568 = vmatprep.subr.mxu0 0.0
          %569 = vmatpush2.msra.mxu0 0.0
          %570 = vmatprep.subr.mxu0 0.0
          %571 = vmatpush2.msra.mxu0 0.0
          %572 = vmatprep.subr.mxu0 0.0
          %573 = vmatpush2.msra.mxu0 0.0
          %574 = vmatprep.subr.mxu0 0.0
          %575 = vmatpush2.msra.mxu0 0.0
          %576 = vmatprep.subr.mxu0 0.0
          %577 = vmatpush2.msra.mxu0 0.0
          %578 = vmatprep.subr.mxu0 0.0
          %579 = vmatpush2.msra.mxu0 0.0
          %580 = vmatprep.subr.mxu0 0.0
          %581 = vmatpush2.msra.mxu0 0.0
          %582 = vmatprep.subr.mxu0 0.0
          %583 = vmatpush2.msra.mxu0 0.0
          %584 = vmatprep.subr.mxu0 0.0
          %585 = vmatpush2.msra.mxu0 0.0
          %586 = vmatprep.subr.mxu0 0.0
          %587 = vmatpush2.msra.mxu0 0.0
          %588 = vmatprep.subr.mxu0 0.0
          %589 = vmatpush2.msra.mxu0 0.0
          %590 = vmatprep.subr.mxu0 0.0
          %591 = vmatpush2.msra.mxu0 0.0
          %592 = vmatprep.subr.mxu0 0.0
          %593 = vmatpush2.msra.mxu0 0.0
          %594 = vmatprep.subr.mxu0 0.0
          %595 = vmatpush2.msra.mxu0 0.0
          %596 = vmatprep.mubr.f32.mxu0 0.0
          %597 = vmatmul.mubr.f32.gmra.mxu0 %v527
          %v598 = vpop.f32.mrf.mxu0
          %v599 = vadd.f32 0.0, %v598
          %v600 = vpop.f32.mrf.mxu0
          %601 = vdwg.mxu0
          %v602 = vadd.f32 %v515, %v599
          %v603 = vld [vmem:[%s2] sm:$0xf]
          %605 = vset.pattern.permute.xlu0 0
          %606 = vperm.xlu0 %605, %v603
          %v607 = vpop.permute.xlu0 %606
          %v609 = vadd.f32 %v602, %v607
          %v610 = vld [vmem:[%s3] sm:$0xf]
          %v611 = vld [vmem:[%s4] sm:$0xf]
          %613 = vset.pattern.permute.xlu0 0
          %614 = vperm.xlu0 %613, %v611
          %v615 = vpop.permute.xlu0 %614
          %v618 = vsel %vm365, %v610, 0
          %v621 = vsel %vm330, %v609, 0
          %623 = vmatprep.subr.mxu0 0.0
          %624 = vmatpush1.msra.mxu0 0.0
          %625 = vmatprep.subr.mxu0 0.0
          %626 = vmatpush1.msra.mxu0 0.0
          %627 = vmatprep.subr.mxu0 0.0
          %628 = vmatpush1.msra.mxu0 0.0
          %629 = vmatprep.subr.mxu0 0.0
          %630 = vmatpush1.msra.mxu0 0.0
          %631 = vmatprep.subr.mxu0 0.0
          %632 = vmatpush1.msra.mxu0 0.0
          %633 = vmatprep.subr.mxu0 0.0
          %634 = vmatpush1.msra.mxu0 0.0
          %635 = vmatprep.subr.mxu0 0.0
          %636 = vmatpush1.msra.mxu0 0.0
          %637 = vmatprep.subr.mxu0 0.0
          %638 = vmatpush1.msra.mxu0 0.0
          %639 = vmatprep.subr.mxu0 0.0
          %640 = vmatpush1.msra.mxu0 0.0
          %641 = vmatprep.subr.mxu0 0.0
          %642 = vmatpush1.msra.mxu0 0.0
          %643 = vmatprep.subr.mxu0 0.0
          %644 = vmatpush1.msra.mxu0 0.0
          %645 = vmatprep.subr.mxu0 0.0
          %646 = vmatpush1.msra.mxu0 0.0
          %647 = vmatprep.subr.mxu0 0.0
          %648 = vmatpush1.msra.mxu0 0.0
          %649 = vmatprep.subr.mxu0 0.0
          %650 = vmatpush1.msra.mxu0 0.0
          %651 = vmatprep.subr.mxu0 0.0
          %652 = vmatpush1.msra.mxu0 0.0
          %653 = vmatprep.subr.mxu0 0.0
          %654 = vmatpush1.msra.mxu0 %v621
          %655 = vmatprep.subr.mxu0 0.0
          %656 = vmatpush2.msra.mxu0 0.0
          %657 = vmatprep.subr.mxu0 0.0
          %658 = vmatpush2.msra.mxu0 0.0
          %659 = vmatprep.subr.mxu0 0.0
          %660 = vmatpush2.msra.mxu0 0.0
          %661 = vmatprep.subr.mxu0 0.0
          %662 = vmatpush2.msra.mxu0 0.0
          %663 = vmatprep.subr.mxu0 0.0
          %664 = vmatpush2.msra.mxu0 0.0
          %665 = vmatprep.subr.mxu0 0.0
          %666 = vmatpush2.msra.mxu0 0.0
          %667 = vmatprep.subr.mxu0 0.0
          %668 = vmatpush2.msra.mxu0 0.0
          %669 = vmatprep.subr.mxu0 0.0
          %670 = vmatpush2.msra.mxu0 0.0
          %671 = vmatprep.subr.mxu0 0.0
          %672 = vmatpush2.msra.mxu0 0.0
          %673 = vmatprep.subr.mxu0 0.0
          %674 = vmatpush2.msra.mxu0 0.0
          %675 = vmatprep.subr.mxu0 0.0
          %676 = vmatpush2.msra.mxu0 0.0
          %677 = vmatprep.subr.mxu0 0.0
          %678 = vmatpush2.msra.mxu0 0.0
          %679 = vmatprep.subr.mxu0 0.0
          %680 = vmatpush2.msra.mxu0 0.0
          %681 = vmatprep.subr.mxu0 0.0
          %682 = vmatpush2.msra.mxu0 0.0
          %683 = vmatprep.subr.mxu0 0.0
          %684 = vmatpush2.msra.mxu0 0.0
          %685 = vmatprep.subr.mxu0 0.0
          %686 = vmatpush2.msra.mxu0 0.0
          %687 = vmatprep.mubr.f32.mxu0 0.0
          %688 = vmatmul.mubr.f32.gmra.mxu0 %v618
          %v689 = vpop.f32.mrf.mxu0
          %v690 = vadd.f32 %v615, %v689
          %v691 = vpop.f32.mrf.mxu0
          %692 = vdwg.mxu0
          %v693 = vand.u32 2147483647, %v690
          %v694 = vsub.f32 0.0, %v693
          %v695 = vmul.f32 %v694, 1.442695
          %v696 = vpow.pop %v695
          %v697 = vadd.f32 %v696, 1.0
          %v698 = vrcp.pop %v697
          %v699 = vmul.f32 1.0, %v698
          %vm700 = vcmp.ge.f32.partialorder %v690, 0.0
          %v701 = vmul.f32 %v696, %v699
          %v702 = vsel %vm700, %v699, %v701
          %v703 = vmul.f32 %v609, %v702
          %v704 = vld [vmem:[%s5] sm:$0xff]
          %v705 = vld [vmem:[%s5 + $0x8] sm:$0xff]
          %v706 = vld [vmem:[%s5 + $0x10] sm:$0xff]
          %v707 = vld [vmem:[%s5 + $0x18] sm:$0xff]
          %v708 = vld [vmem:[%s5 + $0x20] sm:$0xf]
          %v709 = vld [vmem:[%s6] sm:$0xff]
          %v710 = vld [vmem:[%s6 + $0x8] sm:$0xff]
          %v711 = vld [vmem:[%s6 + $0x10] sm:$0xff]
          %v712 = vld [vmem:[%s6 + $0x18] sm:$0xff]
          %v713 = vld [vmem:[%s6 + $0x20] sm:$0xf]
          %715 = vset.pattern.permute.xlu0 0
          %716 = vperm.xlu0 %715, %v709
          %v717 = vpop.permute.xlu0 %716
          %720 = vset.pattern.permute.xlu0 0
          %721 = vperm.xlu0 %720, %v710
          %v722 = vpop.permute.xlu0 %721
          %725 = vset.pattern.permute.xlu0 0
          %726 = vperm.xlu0 %725, %v711
          %v727 = vpop.permute.xlu0 %726
          %730 = vset.pattern.permute.xlu0 0
          %731 = vperm.xlu0 %730, %v712
          %v732 = vpop.permute.xlu0 %731
          %735 = vset.pattern.permute.xlu0 0
          %736 = vperm.xlu0 %735, %v713
          %v737 = vpop.permute.xlu0 %736
          %v740 = vsel %vm365, %v704, 0
          %v743 = vsel %vm365, %v705, 0
          %v746 = vsel %vm365, %v706, 0
          %v749 = vsel %vm365, %v707, 0
          %v752 = vsel %vm365, %v708, 0
          %v755 = vsel %vm330, %v703, 0
          %757 = vmatprep.subr.mxu0 0.0
          %758 = vmatpush1.msra.mxu0 0.0
          %759 = vmatprep.subr.mxu0 0.0
          %760 = vmatpush1.msra.mxu0 0.0
          %761 = vmatprep.subr.mxu0 0.0
          %762 = vmatpush1.msra.mxu0 0.0
          %763 = vmatprep.subr.mxu0 0.0
          %764 = vmatpush1.msra.mxu0 0.0
          %765 = vmatprep.subr.mxu0 0.0
          %766 = vmatpush1.msra.mxu0 0.0
          %767 = vmatprep.subr.mxu0 0.0
          %768 = vmatpush1.msra.mxu0 0.0
          %769 = vmatprep.subr.mxu0 0.0
          %770 = vmatpush1.msra.mxu0 0.0
          %771 = vmatprep.subr.mxu0 0.0
          %772 = vmatpush1.msra.mxu0 0.0
          %773 = vmatprep.subr.mxu0 0.0
          %774 = vmatpush1.msra.mxu0 0.0
          %775 = vmatprep.subr.mxu0 0.0
          %776 = vmatpush1.msra.mxu0 0.0
          %777 = vmatprep.subr.mxu0 0.0
          %778 = vmatpush1.msra.mxu0 0.0
          %779 = vmatprep.subr.mxu0 0.0
          %780 = vmatpush1.msra.mxu0 0.0
          %781 = vmatprep.subr.mxu0 0.0
          %782 = vmatpush1.msra.mxu0 0.0
          %783 = vmatprep.subr.mxu0 0.0
          %784 = vmatpush1.msra.mxu0 0.0
          %785 = vmatprep.subr.mxu0 0.0
          %786 = vmatpush1.msra.mxu0 0.0
          %787 = vmatprep.subr.mxu0 0.0
          %788 = vmatpush1.msra.mxu0 %v755
          %789 = vmatprep.subr.mxu0 0.0
          %790 = vmatpush2.msra.mxu0 0.0
          %791 = vmatprep.subr.mxu0 0.0
          %792 = vmatpush2.msra.mxu0 0.0
          %793 = vmatprep.subr.mxu0 0.0
          %794 = vmatpush2.msra.mxu0 0.0
          %795 = vmatprep.subr.mxu0 0.0
          %796 = vmatpush2.msra.mxu0 0.0
          %797 = vmatprep.subr.mxu0 0.0
          %798 = vmatpush2.msra.mxu0 0.0
          %799 = vmatprep.subr.mxu0 0.0
          %800 = vmatpush2.msra.mxu0 0.0
          %801 = vmatprep.subr.mxu0 0.0
          %802 = vmatpush2.msra.mxu0 0.0
          %803 = vmatprep.subr.mxu0 0.0
          %804 = vmatpush2.msra.mxu0 0.0
          %805 = vmatprep.subr.mxu0 0.0
          %806 = vmatpush2.msra.mxu0 0.0
          %807 = vmatprep.subr.mxu0 0.0
          %808 = vmatpush2.msra.mxu0 0.0
          %809 = vmatprep.subr.mxu0 0.0
          %810 = vmatpush2.msra.mxu0 0.0
          %811 = vmatprep.subr.mxu0 0.0
          %812 = vmatpush2.msra.mxu0 0.0
          %813 = vmatprep.subr.mxu0 0.0
          %814 = vmatpush2.msra.mxu0 0.0
          %815 = vmatprep.subr.mxu0 0.0
          %816 = vmatpush2.msra.mxu0 0.0
          %817 = vmatprep.subr.mxu0 0.0
          %818 = vmatpush2.msra.mxu0 0.0
          %819 = vmatprep.subr.mxu0 0.0
          %820 = vmatpush2.msra.mxu0 0.0
          %821 = vmatprep.mubr.f32.mxu0 0.0
          %822 = vmatmul.mubr.f32.gmra.mxu0 %v740
          %v823 = vpop.f32.mrf.mxu0
          %v824 = vadd.f32 %v717, %v823
          %v825 = vpop.f32.mrf.mxu0
          %826 = vmatprep.mubr.f32.mxu0 0.0
          %827 = vmatmul.mubr.f32.gmra.mxu0 %v743
          %v828 = vpop.f32.mrf.mxu0
          %v829 = vadd.f32 %v722, %v828
          %v830 = vpop.f32.mrf.mxu0
          %831 = vmatprep.mubr.f32.mxu0 0.0
          %832 = vmatmul.mubr.f32.gmra.mxu0 %v746
          %v833 = vpop.f32.mrf.mxu0
          %v834 = vadd.f32 %v727, %v833
          %v835 = vpop.f32.mrf.mxu0
          %836 = vmatprep.mubr.f32.mxu0 0.0
          %837 = vmatmul.mubr.f32.gmra.mxu0 %v749
          %v838 = vpop.f32.mrf.mxu0
          %v839 = vadd.f32 %v732, %v838
          %v840 = vpop.f32.mrf.mxu0
          %841 = vmatprep.mubr.f32.mxu0 0.0
          %842 = vmatmul.mubr.f32.gmra.mxu0 %v752
          %v843 = vpop.f32.mrf.mxu0
          %v844 = vadd.f32 %v737, %v843
          %v845 = vpop.f32.mrf.mxu0
          %846 = vdwg.mxu0
          %v847 = vsel %vm330, %v844, -inf
          %v848 = vmax.f32 %v824, %v847
          %v849 = vmax.f32 %v848, %v829
          %v850 = vmax.f32 %v834, %v839
          %v851 = vmax.f32 %v849, %v850
          %v852 = vrot.slane %v851, 4
          %v853 = vmax.f32 %v851, %v852
          %v854 = vrot.slane %v853, 2
          %v855 = vmax.f32 %v853, %v854
          %v856 = vrot.slane %v855, 1
          %v857 = vmax.f32 %v855, %v856
          %v858 = vsub.f32 %v824, %v857
          %v859 = vsub.f32 %v829, %v857
          %v860 = vsub.f32 %v834, %v857
          %v861 = vsub.f32 %v839, %v857
          %v862 = vsub.f32 %v844, %v857
          %v863 = vmul.f32 %v858, 1.442695
          %v864 = vpow.pop %v863
          %v865 = vmul.f32 %v859, 1.442695
          %v866 = vpow.pop %v865
          %v867 = vmul.f32 %v860, 1.442695
          %v868 = vpow.pop %v867
          %v869 = vmul.f32 %v861, 1.442695
          %v870 = vpow.pop %v869
          %v871 = vmul.f32 %v862, 1.442695
          %v872 = vpow.pop %v871
          %v873 = vadd.f32 %v864, %v866
          %v874 = vadd.f32 %v873, %v868
          %v875 = vadd.f32 %v874, %v870
          %v876 = vsel %vm330, %v872, 0.0
          %v877 = vadd.f32 %v875, %v876
          %v878 = vrot.slane %v877, 4
          %v879 = vadd.f32 %v877, %v878
          %v880 = vrot.slane %v879, 2
          %v881 = vadd.f32 %v879, %v880
          %v882 = vrot.slane %v881, 1
          %v883 = vadd.f32 %v881, %v882
          %v884 = vrcp.pop %v883
          %v885 = vmul.f32 %v864, %v884
          %v886 = vmul.f32 %v866, %v884
          %v887 = vmul.f32 %v868, %v884
          %v888 = vmul.f32 %v870, %v884
          %v889 = vmul.f32 %v872, %v884
          %890 = vst [vmem:[%s315] sm:$0xff] %v885
          %891 = vst [vmem:[%s315 + $0x8] sm:$0xff] %v886
          %892 = vst [vmem:[%s315 + $0x10] sm:$0xff] %v887
          %893 = vst [vmem:[%s315 + $0x18] sm:$0xff] %v888
          %894 = vst [vmem:[%s315 + $0x20] sm:$0xf] %v889
        $region60: #{tpu_custom_call.1} parent=47 // pred_fallthru
          _
        %p895 = scmp.lt.s32.totalorder %s25, 1
        %s896 = scalar_select %p895, %s25, 1
        %s897 = smul.addr %s896, 5
        %s898 = smul.addr %s897, 8
        %s899 = scalar_lea.vmem %s7, %s898
        // Predicated region
        $region61: #{tpu_custom_call.1} parent=47 // pred_check
          %p900 = pneg %p205
        $region62: #{tpu_custom_call.1} parent=47 // pred_check_branch
          %902 = sbr.rel (%p900) target = $region64
        $region63: #{tpu_custom_call.1} parent=47 // pred_region
          _
        $region64: #{tpu_custom_call.1} parent=47 // pred_fallthru
          _
      $region48: #{tpu_custom_call.1} parent=5 // pred_fallthru
        _
      %p903 = scmp.le.s32.totalorder 2, %s16
      // Predicated region
      $region65: #{tpu_custom_call.1} parent=5 // pred_check
        %p904 = pneg %p903
      $region66: #{tpu_custom_call.1} parent=5 // pred_check_branch
        %906 = sbr.rel (%p904) target = $region68
      $region67: #{tpu_custom_call.1} parent=5 // pred_region
        %s907 = ssub.s32 %s16, 2
        // Predicated region
        $region69: #{tpu_custom_call.1} parent=67 // pred_check
          %p908 = pneg %p211
        $region70: #{tpu_custom_call.1} parent=67 // pred_check_branch
          %910 = sbr.rel (%p908) target = $region72
        $region71: #{tpu_custom_call.1} parent=67 // pred_region
          %p911 = scmp.lt.s32.totalorder %s27, 1
          %s912 = scalar_select %p911, %s27, 1
          %s913 = smul.addr %s912, 5
          %s914 = smul.addr %s913, 8
          %s915 = scalar_lea.vmem %s7, %s914
        $region72: #{tpu_custom_call.1} parent=67 // pred_fallthru
          _
      $region68: #{tpu_custom_call.1} parent=5 // pred_fallthru
        _
    $region6: #{tpu_custom_call.1} parent=1 // loop_footer
      %s20 = sadd.s32 1, %s16
    $region7: #{tpu_custom_call.1} parent=1 // loop_footer_branch
      %15 = sbr.rel target = $region3
    $region8: #{tpu_custom_call.1} parent=1 // loop_exit
      _
    %916 = vsyncpa [#allocation4], 1
    %s917 = scalar_lea.sflag [#allocation4], 1
    %918 = vsyncpa %s917, 1

</llo_original>
